<compile_context>
chip_gen: v5e
topology: v5e:2x2
jax: 0.10.0
libtpu: 0.0.40
codegen_flags: <defaults>
</compile_context>

<pallas_src>
import functools
import math

import jax
import jax.numpy as jnp
from jax.experimental import pallas as pl
from jax.experimental.pallas import tpu as pltpu


def _pick_l_tile(length):
    """Tile size along the length (lane) axis.

    Block last dims must be 128-divisible or equal the full dim; when `length` is not a
    multiple of 128 we take the whole row (no padding copy is ever made).
    """
    if length % 128 == 0:
        for t in (512, 256, 128):
            if length % t == 0:
                return t
    return length


# ----------------------------------------------------------------------------- kernels ----


def _pointwise_kernel(x_ref, w_ref, *rest, relu, compute_dtype, has_bias):
    # x_ref: (C_in, tl)   w_ref: (C_out, C_in)   [b_ref: (C_out, 1)]   o_ref: (C_out, tl)
    if has_bias:
        b_ref, o_ref = rest
    else:
        (o_ref,) = rest

    x = x_ref[...]
    w = w_ref[...]
    if compute_dtype is not None:           # cast on the VMEM tile, not in the wrapper
        x = x.astype(compute_dtype)
        w = w.astype(compute_dtype)

    acc = jnp.dot(w, x, preferred_element_type=jnp.float32)     # MXU, f32 accumulation
    if has_bias:
        acc = acc + b_ref[...]                                   # broadcast over lanes
    if relu:
        acc = jnp.maximum(acc, 0.0)
    o_ref[...] = acc.astype(o_ref.dtype)


def _tap_kernel(x_ref, w_ref, *rest, K, stride, tl, relu, compute_dtype, has_bias):
    # x_ref: (C_in, L_in) whole row, VMEM-resident across the L-tile axis
    # w_ref: (K, C_out, C_in)   [b_ref: (C_out, 1)]   o_ref: (C_out, tl)
    if has_bias:
        b_ref, o_ref = rest
    else:
        (o_ref,) = rest

    j = pl.program_id(1)
    base = j * (tl * stride)
    if (tl * stride) % 128 == 0:
        base = pl.multiple_of(base, 128)

    def mm(wk, xs):
        if compute_dtype is not None:
            wk = wk.astype(compute_dtype)
            xs = xs.astype(compute_dtype)
        return jnp.dot(wk, xs, preferred_element_type=jnp.float32)

    acc = None
    if stride == 1:
        for k in range(K):                                       # static unroll over taps
            p = mm(w_ref[k], x_ref[:, pl.ds(base + k, tl)])
            acc = p if acc is None else acc + p
    else:
        # TODO(synk): stride > 1 path is functional but lightly exercised; strided taps are
        # taken from one contiguous VMEM window.
        span = (tl - 1) * stride + K
        xw = x_ref[:, pl.ds(base, span)]
        for k in range(K):
            xs = jax.lax.slice(xw, (0, k), (xw.shape[0], k + (tl - 1) * stride + 1),
                               (1, stride))
            p = mm(w_ref[k], xs)
            acc = p if acc is None else acc + p

    if has_bias:
        acc = acc + b_ref[...]
    if relu:
        acc = jnp.maximum(acc, 0.0)
    o_ref[...] = acc.astype(o_ref.dtype)


# ---------------------------------------------------------------------------- wrappers ----


def _pointwise_conv(x, w2d, bias, *, relu, compute_dtype):
    """K==1, stride==1: out[n] = W @ x[n] (+bias) (+relu), directly in NCL layout."""
    N, C_in, L = x.shape
    C_out = w2d.shape[0]
    tl = _pick_l_tile(L)
    grid = (N, L // tl)

    in_specs = [
        pl.BlockSpec((None, C_in, tl), lambda n, j: (n, 0, j)),   # activation tile
        pl.BlockSpec((C_out, C_in), lambda n, j: (0, 0)),         # weight: VMEM-resident
    ]
    args = [x, w2d]
    if bias is not None:
        in_specs.append(pl.BlockSpec((C_out, 1), lambda n, j: (0, 0)))
        args.append(bias.astype(jnp.float32).reshape(C_out, 1))

    x_b = jnp.dtype(x.dtype).itemsize
    cost = pl.CostEstimate(
        flops=2 * N * L * C_in * C_out,
        bytes_accessed=N * C_in * L * x_b + C_out * C_in * x_b + N * C_out * L * x_b,
        transcendentals=0)

    return pl.pallas_call(
        functools.partial(_pointwise_kernel, relu=relu, compute_dtype=compute_dtype,
                          has_bias=bias is not None),
        out_shape=jax.ShapeDtypeStruct((N, C_out, L), x.dtype),
        grid=grid,
        in_specs=in_specs,
        out_specs=pl.BlockSpec((None, C_out, tl), lambda n, j: (n, 0, j)),
        compiler_params=pltpu.CompilerParams(
            dimension_semantics=("parallel", "parallel")),
        cost_estimate=cost,
    )(*args)


def _tap_conv(x, weight, bias, *, stride, relu, compute_dtype):
    """General K / stride: in-kernel K-tap accumulation over a VMEM-resident input row."""
    N, C_in, L_in = x.shape
    C_out, _, K = weight.shape
    L_out = (L_in - K) // stride + 1
    tl = _pick_l_tile(L_out)
    grid = (N, L_out // tl)

    w_t = jnp.transpose(weight, (2, 0, 1))          # (K, C_out, C_in): contiguous per tap

    in_specs = [
        # Whole (C_in, L_in) row per batch element; block index is constant across j, so
        # Pallas does not re-DMA it per output tile.
        # TODO(synk): for very long sequences, block L with an explicit halo instead of a
        # full resident row.
        pl.BlockSpec((None, C_in, L_in), lambda n, j: (n, 0, 0)),
        pl.BlockSpec((K, C_out, C_in), lambda n, j: (0, 0, 0)),   # weight: VMEM-resident
    ]
    args = [x, w_t]
    if bias is not None:
        in_specs.append(pl.BlockSpec((C_out, 1), lambda n, j: (0, 0)))
        args.append(bias.astype(jnp.float32).reshape(C_out, 1))

    x_b = jnp.dtype(x.dtype).itemsize
    cost = pl.CostEstimate(
        flops=2 * N * L_out * C_in * C_out * K,
        bytes_accessed=N * C_in * L_in * x_b + K * C_out * C_in * x_b
        + N * C_out * L_out * x_b,
        transcendentals=0)

    return pl.pallas_call(
        functools.partial(_tap_kernel, K=K, stride=stride, tl=tl, relu=relu,
                          compute_dtype=compute_dtype, has_bias=bias is not None),
        out_shape=jax.ShapeDtypeStruct((N, C_out, L_out), x.dtype),
        grid=grid,
        in_specs=in_specs,
        out_specs=pl.BlockSpec((None, C_out, tl), lambda n, j: (n, 0, j)),
        compiler_params=pltpu.CompilerParams(
            dimension_semantics=("parallel", "parallel")),
        cost_estimate=cost,
    )(*args)


def initialized_conv1d(x, weight, bias=None, *, stride=1, padding=0, relu=False,
                       compute_dtype=None):
    """Forward of Initialized_Conv1d (groups=1). x: (N, C_in, L), weight: (C_out, C_in, K)."""
    N, C_in, L = x.shape
    C_out, C_in_w, K = weight.shape
    # TODO(synk): groups > 1 (depthwise conv) is not implemented; the module default is groups=1.
    assert C_in_w == C_in, "only groups=1 is supported"

    if padding > 0:
        # TODO(synk): fold the conv zero-padding into the kernel (masked edge taps) to avoid
        # this one HBM copy; padding=0 is the module default so the common path never pads.
        x = jnp.pad(x, ((0, 0), (0, 0), (padding, padding)))

    if K == 1 and stride == 1:
        return _pointwise_conv(x, weight[:, :, 0], bias, relu=relu,
                               compute_dtype=compute_dtype)
    return _tap_conv(x, weight, bias, stride=stride, relu=relu,
                     compute_dtype=compute_dtype)


def init_conv1d_weight(key, in_channels, out_channels, kernel_size, relu):
    """Deterministic re-implementation of the module's weight init (not bit-identical RNG)."""
    shape = (out_channels, in_channels, kernel_size)
    fan_in = in_channels * kernel_size
    fan_out = out_channels * kernel_size
    if relu:
        # nn.init.kaiming_normal_(w, nonlinearity='relu'): std = sqrt(2 / fan_in)
        std = math.sqrt(2.0 / fan_in)
        return std * jax.random.normal(key, shape, dtype=jnp.float32)
    # nn.init.xavier_uniform_(w): bound = sqrt(6 / (fan_in + fan_out))
    bound = math.sqrt(6.0 / (fan_in + fan_out))
    return jax.random.uniform(key, shape, dtype=jnp.float32, minval=-bound, maxval=bound)


if __name__ == "__main__":
    key = jax.random.PRNGKey(0)
    kx, kw1, kw2, kb = jax.random.split(key, 4)

    N, C_in, L = 2, 4, 16

    # Quantize test inputs to bf16-representable values so the numerical check is robust to
    # whichever MXU precision path (full f32 or bf16 passes) the backend picks.
    def q(a):
        return a.astype(jnp.bfloat16).astype(jnp.float32)

    x = q(jax.random.normal(kx, (N, C_in, L), dtype=jnp.float32))

    def ref_conv1d(x, w, b, stride, padding, relu):
        out = jax.lax.conv_general_dilated(
            x, w, window_strides=(stride,), padding=[(padding, padding)],
            dimension_numbers=("NCH", "OIH", "NCH"))
        if b is not None:
            out = out + b[None, :, None]
        return jnp.maximum(out, 0.0) if relu else out

    # Case 1: module defaults (K=1, stride=1, padding=0, bias=False) + relu -> pointwise path.
    C_out1, K1 = 8, 1
    w1 = q(init_conv1d_weight(kw1, C_in, C_out1, K1, relu=True))
    out1 = jax.block_until_ready(initialized_conv1d(x, w1, relu=True))
    ref1 = ref_conv1d(x, w1, None, 1, 0, True)
    assert out1.shape == (N, C_out1, L), out1.shape
    assert jnp.allclose(out1, ref1, atol=1e-4, rtol=1e-4), float(jnp.max(jnp.abs(out1 - ref1)))

    # Case 2: K=3, padding=1, no relu -> in-kernel K-tap path (no im2col).
    C_out2, K2 = 6, 3
    w2 = q(init_conv1d_weight(kw2, C_in, C_out2, K2, relu=False))
    out2 = jax.block_until_ready(initialized_conv1d(x, w2, padding=1, relu=False))
    ref2 = ref_conv1d(x, w2, None, 1, 1, False)
    assert out2.shape == (N, C_out2, L), out2.shape
    assert jnp.allclose(out2, ref2, atol=1e-4, rtol=1e-4), float(jnp.max(jnp.abs(out2 - ref2)))

    # Case 3: bf16 MXU inputs (cast inside the kernel) with f32 accumulation.
    out3 = jax.block_until_ready(
        initialized_conv1d(x, w1, relu=True, compute_dtype=jnp.bfloat16))
    assert jnp.allclose(out3, ref1, atol=1e-4, rtol=1e-4), float(jnp.max(jnp.abs(out3 - ref1)))

    # Case 4: optional bias=True configuration on the pointwise path (specialized kernel variant).
    b1 = q(0.1 * jax.random.normal(kb, (C_out1,), dtype=jnp.float32))
    out4 = jax.block_until_ready(initialized_conv1d(x, w1, bias=b1, relu=False))
    ref4 = ref_conv1d(x, w1, b1, 1, 0, False)
    assert jnp.allclose(out4, ref4, atol=1e-4, rtol=1e-4), float(jnp.max(jnp.abs(out4 - ref4)))

    print("KERNEL_OK")
</pallas_src>

<mosaic_0001>
module attributes {stable_mosaic.version = 11 : i64} {
  func.func @_pointwise_kernel(%arg0: i32, %arg1: i32, %arg2: memref<1x4x16xf32, #tpu.memory_space<vmem>>, %arg3: memref<8x4xf32, #tpu.memory_space<vmem>>, %arg4: memref<1x8x16xf32, #tpu.memory_space<vmem>>) attributes {dimension_semantics = [#tpu.dimension_semantics<parallel>, #tpu.dimension_semantics<parallel>], iteration_bounds = array<i64: 2, 1>, scalar_prefetch = 0 : i64, scratch_operands = 0 : i64, tpu.core_type = #tpu.core_type<tc>, window_params = [{transform_indices = @transform_0, window_bounds = array<i64: 1, 4, 16>}, {pipeline_mode = #tpu.pipeline_mode<synchronous>, transform_indices = @transform_1, window_bounds = array<i64: 8, 4>}, {transform_indices = @transform_2, window_bounds = array<i64: 1, 8, 16>}]} {
    %c0 = arith.constant 0 : index
    %c0_0 = arith.constant 0 : index
    %c0_1 = arith.constant 0 : index
    %0 = vector.load %arg2[%c0, %c0_0, %c0_1] : memref<1x4x16xf32, #tpu.memory_space<vmem>>, vector<1x4x16xf32>
    %1 = vector.shape_cast %0 : vector<1x4x16xf32> to vector<4x16xf32>
    %c0_2 = arith.constant 0 : index
    %c0_3 = arith.constant 0 : index
    %2 = vector.load %arg3[%c0_2, %c0_3] : memref<8x4xf32, #tpu.memory_space<vmem>>, vector<8x4xf32>
    %cst = arith.constant dense<0.000000e+00> : vector<8x16xf32>
    %3 = tpu.matmul %2, %1, %cst {dimension_numbers = #tpu.dot_dimension_numbers<[1], [0], [0], [1], [0, 0, 1, 1], [], []>} : vector<8x4xf32>, vector<4x16xf32>, vector<8x16xf32> -> vector<8x16xf32>
    %cst_4 = arith.constant 0.000000e+00 : f32
    %4 = vector.broadcast %cst_4 : f32 to vector<8x16xf32>
    %5 = arith.maximumf %3, %4 : vector<8x16xf32>
    %c0_5 = arith.constant 0 : index
    %c0_6 = arith.constant 0 : index
    %c0_7 = arith.constant 0 : index
    %6 = vector.load %arg4[%c0_5, %c0_6, %c0_7] : memref<1x8x16xf32, #tpu.memory_space<vmem>>, vector<1x8x16xf32>
    %7 = vector.shape_cast %6 : vector<1x8x16xf32> to vector<8x16xf32>
    %8 = vector.shape_cast %5 : vector<8x16xf32> to vector<1x8x16xf32>
    tpu.vector_store %arg4[%c0_5, %c0_6, %c0_7], %8 {strides = array<i32>} : memref<1x8x16xf32, #tpu.memory_space<vmem>>, vector<1x8x16xf32>,
    return
  }
  func.func @transform_0(%arg0: i32, %arg1: i32) -> (i32, i32, i32) {
    %c0_i32 = arith.constant 0 : i32
    %c0_i32_0 = arith.constant 0 : i32
    return %arg0, %c0_i32, %arg1 : i32, i32, i32
  }
  func.func @transform_1(%arg0: i32, %arg1: i32) -> (i32, i32) {
    %c0_i32 = arith.constant 0 : i32
    %c0_i32_0 = arith.constant 0 : i32
    %c0_i32_1 = arith.constant 0 : i32
    return %c0_i32, %c0_i32_0 : i32, i32
  }
  func.func @transform_2(%arg0: i32, %arg1: i32) -> (i32, i32, i32) {
    %c0_i32 = arith.constant 0 : i32
    %c0_i32_0 = arith.constant 0 : i32
    return %arg0, %c0_i32, %arg1 : i32, i32, i32
  }
}

</mosaic_0001>

<llo_original>
// kernel: tpu_custom_call.1
$region0: #{tpu_custom_call.1}
  #allocation0 [shape = 'u32[]', space=smem, size = 0x4, offset = 0x4, fixed_abs, tag = 'smem constant byte address 0x4 - core index']
  #allocation1 [shape = 'u32[72,128]{1,0:T(1,128)}', space=vmem, size = 0x9000, scoped, tag = 'internal scratch']
  %s0 = inlined_call_operand.vmem [shape: f32[2,4,16], index: 0, kind: input, shape index: {}]
  %s1 = inlined_call_operand.vmem [shape: f32[8,4], index: 1, kind: input, shape index: {}]
  %s2 = inlined_call_operand.hbm [shape: f32[2,8,16], index: 2, kind: output, shape index: {}]
  %s3 = sld [smem:[#allocation0]]
  $region41: #{tpu_custom_call.1} parent=0
    _
  %s5 = ssub.s32 1, %s3
  %s6 = scalar_select 0, %s5, %s3
  $region1: #{tpu_custom_call.1} parent=0
    #allocation2 [shape = 'u8[8192]{0}', space=vmem, size = 0x2000, scoped, tag = 'output window, operand 0']
    #allocation3 [shape = 's32[2]{0}', space=sflag, size = 0x8, scoped, tag = 'scoped memory for tpu_custom_call.1']
    %7 = vsyncpa [#allocation3], 0
    %s8 = scalar_lea.sflag [#allocation3], 1
    %9 = vsyncpa %s8, 0
    loop: start=0, step=1, limit=4
    $region2: #{tpu_custom_call.1} parent=1 // loop_pre_header
      _
    $region3: #{tpu_custom_call.1} parent=1 // loop_header
      %s11 = sphi 0, %s15
      %p12 = scmp.ge.s32.totalorder %s11, 4
      %s18 = sphi 0, %s30
      %s19 = sphi 0, %s26
      %s20 = sphi 0, %s18
      %s21 = sphi 0, %s19
      %s22 = sphi 0, %s20
      %s23 = sphi 0, %s21
      %s35 = sphi 0, %s37
      %s38 = sphi 0, %s35
      %s39 = sphi 0, %s38
      %s55 = sphi 0, %s39
      %s59 = sphi 0, %s59
      %s61 = sphi 0, %s59
      %s62 = sphi 0, %s61
      %s76 = sphi 0, %s62
      %s84 = sphi 0, %s86
      %s87 = sphi 0, %s84
      %s88 = sphi 0, %s87
      %s104 = sphi 0, %s88
    $region4: #{tpu_custom_call.1} parent=1 // loop_header_branch
      %14 = sbr.rel (%p12) target = $region8
    $region5: #{tpu_custom_call.1} parent=1 // loop_body
      %s16 = ssub.s32 %s11, 1
      %s17 = ssub.s32 %s11, 2
      %s24 = sadd.s32 1, %s19
      %p25 = scmp.ge.s32.totalorder %s24, 1
      %s26 = scalar_select %p25, 0, %s24
      %s27 = sadd.s32 1, %s18
      %s28 = scalar_select %p25, %s27, %s18
      %p29 = scmp.ge.s32.totalorder %s28, 2
      %s30 = scalar_select %p29, 0, %s28
      %s31 = ssub.s32 %s18, %s30
      %s32 = ssub.s32 %s19, %s26
      %s33 = sor.u32 %s31, %s32
      %p34 = scmp.eq.s32.totalorder %s33, 0
      %s36 = sadd.s32 %s35, 1
      %s37 = scalar_select %p34, %s35, %s36
      %p40 = pneg %p34
      %p41 = scmp.eq.s32.totalorder %s11, 1
      %p42 = por %p40, %p41
      %p43 = scmp.ne.s32.totalorder %s35, %s38
      %p44 = scmp.eq.s32.totalorder %s11, 0
      %p45 = por %p43, %p44
      %p46 = scmp.ne.s32.totalorder %s35, %s38
      %p47 = scmp.eq.s32.totalorder %s16, 1
      %p48 = por %p46, %p47
      %p49 = scmp.ne.s32.totalorder %s38, %s39
      %p50 = scmp.eq.s32.totalorder %s16, 0
      %p51 = por %p49, %p50
      %p52 = scmp.ne.s32.totalorder %s38, %s39
      %p53 = scmp.eq.s32.totalorder %s17, 1
      %p54 = por %p52, %p53
      %p56 = scmp.ne.s32.totalorder %s39, %s55
      %p57 = scmp.eq.s32.totalorder %s17, 0
      %p58 = por %p56, %p57
      %s60 = sadd.s32 %s59, 1
      %p63 = scmp.eq.s32.totalorder %s11, 1
      %p64 = scmp.ne.s32.totalorder %s59, %s61
      %p65 = scmp.eq.s32.totalorder %s11, 0
      %p66 = por %p64, %p65
      %p67 = scmp.ne.s32.totalorder %s59, %s61
      %p68 = scmp.eq.s32.totalorder %s16, 1
      %p69 = por %p67, %p68
      %p70 = scmp.ne.s32.totalorder %s61, %s62
      %p71 = scmp.eq.s32.totalorder %s16, 0
      %p72 = por %p70, %p71
      %p73 = scmp.ne.s32.totalorder %s61, %s62
      %p74 = scmp.eq.s32.totalorder %s17, 1
      %p75 = por %p73, %p74
      %p77 = scmp.ne.s32.totalorder %s62, %s76
      %p78 = scmp.eq.s32.totalorder %s17, 0
      %p79 = por %p77, %p78
      %s80 = ssub.s32 %s18, %s30
      %s81 = ssub.s32 %s19, %s26
      %s82 = sor.u32 %s80, %s81
      %p83 = scmp.eq.s32.totalorder %s82, 0
      %s85 = sadd.s32 %s84, 1
      %s86 = scalar_select %p83, %s84, %s85
      %p89 = pneg %p83
      %p90 = scmp.eq.s32.totalorder %s11, 1
      %p91 = por %p89, %p90
      %p92 = scmp.ne.s32.totalorder %s84, %s87
      %p93 = scmp.eq.s32.totalorder %s11, 0
      %p94 = por %p92, %p93
      %p95 = scmp.ne.s32.totalorder %s84, %s87
      %p96 = scmp.eq.s32.totalorder %s16, 1
      %p97 = por %p95, %p96
      %p98 = scmp.ne.s32.totalorder %s87, %s88
      %p99 = scmp.eq.s32.totalorder %s16, 0
      %p100 = por %p98, %p99
      %p101 = scmp.ne.s32.totalorder %s87, %s88
      %p102 = scmp.eq.s32.totalorder %s17, 1
      %p103 = por %p101, %p102
      %p105 = scmp.ne.s32.totalorder %s88, %s104
      %p106 = scmp.eq.s32.totalorder %s17, 0
      %p107 = por %p105, %p106
      %p108 = scmp.le.s32.totalorder 1, %s11
      %p109 = scmp.lt.s32.totalorder %s11, 3
      %p110 = pnand %p108, %p109
      %p111 = pneg %p110
      // Predicated region
      $region9: #{tpu_custom_call.1} parent=5 // pred_check
        _
      $region10: #{tpu_custom_call.1} parent=5 // pred_check_branch
        %113 = sbr.rel (%p110) target = $region12
      $region11: #{tpu_custom_call.1} parent=5 // pred_region
        %s114 = ssub.s32 %s11, 1
        // Predicated region
        $region13: #{tpu_custom_call.1} parent=11 // pred_check
          %p115 = pneg %p72
        $region14: #{tpu_custom_call.1} parent=11 // pred_check_branch
          %117 = sbr.rel (%p115) target = $region16
        $region15: #{tpu_custom_call.1} parent=11 // pred_region
          _
        $region16: #{tpu_custom_call.1} parent=11 // pred_fallthru
          _
      $region12: #{tpu_custom_call.1} parent=5 // pred_fallthru
        _
      %p118 = scmp.lt.s32.totalorder %s11, 2
      // Predicated region
      $region17: #{tpu_custom_call.1} parent=5 // pred_check
        %p119 = pneg %p118
      $region18: #{tpu_custom_call.1} parent=5 // pred_check_branch
        %121 = sbr.rel (%p119) target = $region20
      $region19: #{tpu_custom_call.1} parent=5 // pred_region
        // Predicated region
        $region21: #{tpu_custom_call.1} parent=19 // pred_check
          %p122 = pneg %p45
        $region22: #{tpu_custom_call.1} parent=19 // pred_check_branch
          %124 = sbr.rel (%p122) target = $region24
        $region23: #{tpu_custom_call.1} parent=19 // pred_region
          %p125 = scmp.lt.s32.totalorder %s18, 1
          %s126 = scalar_select %p125, %s18, 1
          %p127 = scmp.lt.s32.totalorder %s19, 0
          %s128 = scalar_select %p127, %s19, 0
          %s129 = sadd.s32 %s128, %s126
          %s130 = smul.addr %s129, 4
          %s131 = scalar_lea.vmem %s0, %s130
        $region24: #{tpu_custom_call.1} parent=19 // pred_fallthru
          _
      $region20: #{tpu_custom_call.1} parent=5 // pred_fallthru
        _
      %p132 = scmp.le.s32.totalorder 1, %s11
      %p133 = scmp.lt.s32.totalorder %s11, 3
      %p134 = pnand %p132, %p133
      %p135 = pneg %p134
      // Predicated region
      $region25: #{tpu_custom_call.1} parent=5 // pred_check
        _
      $region26: #{tpu_custom_call.1} parent=5 // pred_check_branch
        %137 = sbr.rel (%p134) target = $region28
      $region27: #{tpu_custom_call.1} parent=5 // pred_region
        %s138 = ssub.s32 %s11, 1
        %p139 = scmp.lt.s32.totalorder %s20, 1
        %s140 = scalar_select %p139, %s20, 1
        %p141 = scmp.lt.s32.totalorder %s21, 0
        %s142 = scalar_select %p141, %s21, 0
        %s143 = sadd.s32 %s142, %s140
        %s144 = smul.addr %s143, 4
        %s145 = scalar_lea.vmem %s0, %s144
        %p146 = pneg %p51
        %p147 = pneg %p48
        %p148 = pneg %p72
        %p149 = pneg %p69
        %p150 = pneg %p100
        %p151 = pneg %p97
        %s152 = sand.u32 %s87, 1
        %s153 = scalar_lea.sflag [#allocation3], %s152
        %s154 = sand.u32 %s87, 1
        %s155 = smul.addr %s154, 8
        %s156 = scalar_lea.vmem [#allocation2], %s155
        %p157 = scmp.lt.s32.totalorder %s20, 1
        %s158 = scalar_select %p157, %s20, 1
        %p159 = scmp.lt.s32.totalorder %s21, 0
        %s160 = scalar_select %p159, %s21, 0
        %s161 = sadd.s32 %s160, %s158
        %s162 = smul.addr %s161, 4
        %s163 = scalar_lea.vmem %s0, %s162
        %v164 = vld [vmem:[%s163] sm:$0xf]
        %v165 = vld [vmem:[%s1] sm:$0xff]
        %vm166 = vcmask 31744
        %v168 = vsel %vm166, %v165, 0
        %vm170 = vcmask 1043456
        %v172 = vsel %vm170, %v164, 0
        %174 = vmatpush.msra.mxu0 0.0
        %175 = vmatpush.msra.mxu0 0.0
        %176 = vmatpush.msra.mxu0 0.0
        %177 = vmatpush.msra.mxu0 0.0
        %178 = vmatpush.msra.mxu0 0.0
        %179 = vmatpush.msra.mxu0 0.0
        %180 = vmatpush.msra.mxu0 0.0
        %181 = vmatpush.msra.mxu0 0.0
        %182 = vmatpush.msra.mxu0 0.0
        %183 = vmatpush.msra.mxu0 0.0
        %184 = vmatpush.msra.mxu0 0.0
        %185 = vmatpush.msra.mxu0 0.0
        %186 = vmatpush.msra.mxu0 0.0
        %187 = vmatpush.msra.mxu0 0.0
        %188 = vmatpush.msra.mxu0 0.0
        %189 = vmatpush.msra.mxu0 %v172
        %190 = vmatmul.f32.gmra.mxu0 %v168
        %v191 = vpop.f32.mrf.mxu0
        %v192 = vadd.f32 0.0, %v191
        %193 = vdwg.mxu0
        %v194 = vmax.f32 %v192, 0.0
        %vm195 = vcmask 130048
        %196 = vst.msk [vmem:[%s156] sm:$0xff] %vm195, %v194
        %s197 = sand.u32 %s87, 1
        %s198 = scalar_lea.sflag [#allocation3], %s197
        %s199 = sand.u32 %s87, 1
        %s200 = smul.addr %s199, 8
        %s201 = scalar_lea.vmem [#allocation2], %s200
        // Predicated region
        $region29: #{tpu_custom_call.1} parent=27 // pred_check
          %p202 = pneg %p97
        $region30: #{tpu_custom_call.1} parent=27 // pred_check_branch
          %204 = sbr.rel (%p202) target = $region32
        $region31: #{tpu_custom_call.1} parent=27 // pred_region
          %206 = vsyncadd %s198, 0
          %s207 = sadd.s32 %s21, %s20
          %s208 = smul.addr %s207, 8
          %s209 = scalar_lea.hbm %s2, %s208
          %s211 = sshll.u32 %s201, 4
          %s212 = int_to_ptr.vmem [resolvable:$true] %s211
          %s213 = sshll.u32 %s209, 4
          %s214 = int_to_ptr.hbm [resolvable:$true] %s213
          %216 = dma.vmem_to_hbm [thread:$0]  %s212, 128, %s214, %s198
        $region32: #{tpu_custom_call.1} parent=27 // pred_fallthru
          _
      $region28: #{tpu_custom_call.1} parent=5 // pred_fallthru
        _
      %p217 = scmp.le.s32.totalorder 2, %s11
      // Predicated region
      $region33: #{tpu_custom_call.1} parent=5 // pred_check
        %p218 = pneg %p217
      $region34: #{tpu_custom_call.1} parent=5 // pred_check_branch
        %220 = sbr.rel (%p218) target = $region36
      $region35: #{tpu_custom_call.1} parent=5 // pred_region
        %s221 = ssub.s32 %s11, 2
        // Predicated region
        $region37: #{tpu_custom_call.1} parent=35 // pred_check
          %p222 = pneg %p103
        $region38: #{tpu_custom_call.1} parent=35 // pred_check_branch
          %224 = sbr.rel (%p222) target = $region40
        $region39: #{tpu_custom_call.1} parent=35 // pred_region
          %s225 = sand.u32 %s88, 1
          %s226 = scalar_lea.sflag [#allocation3], %s225
          %s227 = sand.u32 %s88, 1
          %s228 = smul.addr %s227, 8
          %s229 = scalar_lea.vmem [#allocation2], %s228
          %231 = dma.done %s226, 128
        $region40: #{tpu_custom_call.1} parent=35 // pred_fallthru
          _
      $region36: #{tpu_custom_call.1} parent=5 // pred_fallthru
        _
    $region6: #{tpu_custom_call.1} parent=1 // loop_footer
      %s15 = sadd.s32 1, %s11
    $region7: #{tpu_custom_call.1} parent=1 // loop_footer_branch
      %10 = sbr.rel target = $region3
    $region8: #{tpu_custom_call.1} parent=1 // loop_exit
      _
    %232 = vsyncpa [#allocation3], 1
    %s233 = scalar_lea.sflag [#allocation3], 1
    %234 = vsyncpa %s233, 1

</llo_original>
